<compile_context>
chip_gen: v7x
topology: tpu7x:2x2x1
jax: 0.10.0
libtpu: 0.0.40
codegen_flags: <defaults>
</compile_context>

<pallas_src>
import numpy as np
import jax
import jax.numpy as jnp
from jax.experimental import pallas as pl
from jax.experimental.pallas import tpu as pltpu


def _make_fused_kernel(n_layers: int, tb: int):
    """Fused forward over `n_layers` QuantumInspiredLayers.

    Kernel ref layout (all VMEM):
      x_ref,
      for each non-final layer i : w_i, packed_i   (packed_i rows: phase/cos/sin)
      for the final layer        : w_last, p_last  ((1, Dout))
      out_ref
    """
    def kernel(x_ref, *refs):
        out_ref = refs[-1]
        prefs = refs[:-1]
        TB = tb

        xr = x_ref[...]          # (TB, D0) real input
        xi = None                # purely real -> no imaginary plane yet

        idx = 0
        for li in range(n_layers):
            final = (li == n_layers - 1)
            w = prefs[idx][...]                      # (Din, Dout)
            if final:
                p = prefs[idx + 1][...]              # (1, Dout)
                cp = sp = None
            else:
                packed = prefs[idx + 1][...]         # (8, Dout): rows 0/1/2 = p/cos/sin
                p = packed[0:1, :]
                cp = packed[1:2, :]
                sp = packed[2:3, :]
            idx += 2

            if xi is None:
                # --- layer 0: real input. si == 0 => amplitude is real. ---
                mr = jnp.dot(xr, w, preferred_element_type=jnp.float32)
                sr = mr + p
                ar = jnp.sin(sr)
                ai = None
            else:
                # --- complex input: one stacked MXU matmul for real+imag planes. ---
                stacked = jnp.concatenate([xr, xi], axis=0)          # (2*TB, Din)
                m = jnp.dot(stacked, w, preferred_element_type=jnp.float32)
                sr = m[:TB, :] + p                                   # Re(x@W) + phase
                si = m[TB:, :]                                       # Im(x@W)
                # sin(a + ib) = sin(a)cosh(b) + i cos(a)sinh(b)
                e_pos = jnp.exp(si)
                e_neg = jnp.exp(-si)     # exact (no approx reciprocal), per review
                cosh_si = 0.5 * (e_pos + e_neg)
                sinh_si = 0.5 * (e_pos - e_neg)
                ar = jnp.sin(sr) * cosh_si
                ai = jnp.cos(sr) * sinh_si

            if final:
                # |amplitude * exp(i*phase)| == |amplitude| -> skip the rotation.
                if ai is None:
                    out_ref[...] = jnp.abs(ar)
                else:
                    out_ref[...] = jnp.sqrt(ar * ar + ai * ai)
            else:
                # amplitude * exp(i*phase)
                if ai is None:
                    xr = ar * cp
                    xi = ar * sp
                else:
                    xr = ar * cp - ai * sp
                    xi = ar * sp + ai * cp

    return kernel


def biomimetic_forward(x, params):
    """BiomimeticNetwork.forward: fused layer chain in one Pallas call, returns |.|."""
    n = len(params)
    if n == 0:
        return jnp.abs(x)

    x = x.astype(jnp.float32)
    B, d_in = x.shape
    d_out = params[-1][0].shape[1]

    # Batch tile: multiple of 8 (f32 sublane tile), capped at 128 by vreg pressure.
    if B % 8 == 0:
        TB = next(t for t in (128, 64, 32, 16, 8) if B % t == 0)
    else:
        TB = B              # whole-array block (tiny / irregular batch)
    grid = (B // TB,)

    vmem = pltpu.MemorySpace.VMEM
    args = [x]
    in_specs = [pl.BlockSpec((TB, d_in), lambda i: (i, 0), memory_space=vmem)]

    for i, (w, p) in enumerate(params):
        w = w.astype(jnp.float32)
        p1 = p.astype(jnp.float32).reshape(1, -1)
        args.append(w)
        in_specs.append(
            pl.BlockSpec(tuple(w.shape), lambda i: (0, 0), memory_space=vmem))
        if i == n - 1:
            # Final layer only needs the phase inside the pre-activation sum.
            args.append(p1)
            in_specs.append(
                pl.BlockSpec(tuple(p1.shape), lambda i: (0, 0), memory_space=vmem))
        else:
            # Pack [phase, cos(phase), sin(phase)] into one (8, Dout) operand:
            # one DMA descriptor instead of three tile-padded (1, Dout) arrays.
            dout = p1.shape[1]
            packed = jnp.zeros((8, dout), jnp.float32)
            packed = packed.at[0].set(p1[0])
            packed = packed.at[1].set(jnp.cos(p1[0]))
            packed = packed.at[2].set(jnp.sin(p1[0]))
            args.append(packed)
            in_specs.append(
                pl.BlockSpec((8, dout), lambda i: (0, 0), memory_space=vmem))

    out_specs = pl.BlockSpec((TB, d_out), lambda i: (i, 0), memory_space=vmem)

    # TODO(synk): if output store bandwidth ever matters at large batch, present a
    # lane-dense output (last dim a multiple of 128) instead of d_out=16.
    return pl.pallas_call(
        _make_fused_kernel(n, TB),
        grid=grid,
        in_specs=in_specs,
        out_specs=out_specs,
        out_shape=jax.ShapeDtypeStruct((B, d_out), jnp.float32),
        compiler_params=pltpu.CompilerParams(dimension_semantics=("parallel",)),
    )(*args)


def init_biomimetic_params(key, layers):
    """Matches QuantumInspiredLayer.__init__: W ~ randn(in,out)*pi, phase ~ randn(out)*pi
    (deterministic via jax PRNG, not torch RNG)."""
    params = []
    for i in range(len(layers) - 1):
        key, kw, kp = jax.random.split(key, 3)
        w = jax.random.normal(kw, (layers[i], layers[i + 1]), jnp.float32) * np.pi
        p = jax.random.normal(kp, (layers[i + 1],), jnp.float32) * np.pi
        params.append((w, p))
    return params


def biomimetic_forward_ref(x, params):
    """Pure-JAX complex64 reference mirroring the PyTorch module (HIGHEST precision
    matmuls so the reference itself is not the noise source)."""
    hp = jax.lax.Precision.HIGHEST
    z = x.astype(jnp.complex64)
    for w, p in params:
        pre = jnp.matmul(z, w.astype(jnp.complex64), precision=hp) \
              + p.astype(jnp.complex64)
        amp = jnp.sin(pre)
        z = amp * jnp.exp(1j * p.astype(jnp.complex64))
    return jnp.abs(z)


if __name__ == "__main__":
    key = jax.random.PRNGKey(0)
    kx, kparams = jax.random.split(key)

    layers = [16, 32, 16]      # BiomimeticNetwork([16, 32, 16]) -> 2 quantum layers
    batch = 8                  # multiple of 8: real/imag stack splits on a sublane tile
    x = jax.random.normal(kx, (batch, layers[0]), jnp.float32)
    params = init_biomimetic_params(kparams, layers)

    out = jax.block_until_ready(biomimetic_forward(x, params))
    ref = jax.block_until_ready(biomimetic_forward_ref(x, params))

    assert out.shape == (batch, layers[-1]) and out.dtype == jnp.float32
    assert bool(jnp.all(jnp.isfinite(out)))
    rel_err = float(jnp.max(jnp.abs(out - ref)) / (jnp.max(jnp.abs(ref)) + 1e-6))
    assert rel_err < 5e-2, f"mismatch vs complex64 reference: rel_err={rel_err}"

    print("KERNEL_OK")
</pallas_src>

<mosaic_0001>
module attributes {stable_mosaic.version = 11 : i64} {
  func.func @kernel(%arg0: i32, %arg1: memref<8x16xf32, #tpu.memory_space<vmem>>, %arg2: memref<16x32xf32, #tpu.memory_space<vmem>>, %arg3: memref<8x32xf32, #tpu.memory_space<vmem>>, %arg4: memref<32x16xf32, #tpu.memory_space<vmem>>, %arg5: memref<1x16xf32, #tpu.memory_space<vmem>>, %arg6: memref<8x16xf32, #tpu.memory_space<vmem>>) attributes {dimension_semantics = [#tpu.dimension_semantics<parallel>], iteration_bounds = array<i64: 1>, scalar_prefetch = 0 : i64, scratch_operands = 0 : i64, tpu.core_type = #tpu.core_type<tc>, window_params = [{transform_indices = @transform_0, window_bounds = array<i64: 8, 16>}, {pipeline_mode = #tpu.pipeline_mode<synchronous>, transform_indices = @transform_1, window_bounds = array<i64: 16, 32>}, {pipeline_mode = #tpu.pipeline_mode<synchronous>, transform_indices = @transform_2, window_bounds = array<i64: 8, 32>}, {pipeline_mode = #tpu.pipeline_mode<synchronous>, transform_indices = @transform_3, window_bounds = array<i64: 32, 16>}, {pipeline_mode = #tpu.pipeline_mode<synchronous>, transform_indices = @transform_4, window_bounds = array<i64: 1, 16>}, {transform_indices = @transform_5, window_bounds = array<i64: 8, 16>}]} {
    %c0 = arith.constant 0 : index
    %c0_0 = arith.constant 0 : index
    %0 = vector.load %arg1[%c0, %c0_0] : memref<8x16xf32, #tpu.memory_space<vmem>>, vector<8x16xf32>
    %c0_1 = arith.constant 0 : index
    %c0_2 = arith.constant 0 : index
    %1 = vector.load %arg2[%c0_1, %c0_2] : memref<16x32xf32, #tpu.memory_space<vmem>>, vector<16x32xf32>
    %c0_3 = arith.constant 0 : index
    %c0_4 = arith.constant 0 : index
    %2 = vector.load %arg3[%c0_3, %c0_4] : memref<8x32xf32, #tpu.memory_space<vmem>>, vector<8x32xf32>
    %3 = vector.extract_strided_slice %2 {offsets = [0, 0], sizes = [1, 32], strides = [1, 1]} : vector<8x32xf32> to vector<1x32xf32>
    %4 = vector.extract_strided_slice %2 {offsets = [1, 0], sizes = [1, 32], strides = [1, 1]} : vector<8x32xf32> to vector<1x32xf32>
    %5 = vector.extract_strided_slice %2 {offsets = [2, 0], sizes = [1, 32], strides = [1, 1]} : vector<8x32xf32> to vector<1x32xf32>
    %cst = arith.constant dense<0.000000e+00> : vector<8x32xf32>
    %6 = tpu.matmul %0, %1, %cst {dimension_numbers = #tpu.dot_dimension_numbers<[1], [0], [0], [1], [0, 0, 1, 1], [], []>} : vector<8x16xf32>, vector<16x32xf32>, vector<8x32xf32> -> vector<8x32xf32>
    %7 = vector.broadcast %3 : vector<1x32xf32> to vector<8x32xf32>
    %8 = arith.addf %6, %7 : vector<8x32xf32>
    %9 = math.sin %8 : vector<8x32xf32>
    %10 = vector.broadcast %4 : vector<1x32xf32> to vector<8x32xf32>
    %11 = arith.mulf %9, %10 : vector<8x32xf32>
    %12 = vector.broadcast %5 : vector<1x32xf32> to vector<8x32xf32>
    %13 = arith.mulf %9, %12 : vector<8x32xf32>
    %c0_5 = arith.constant 0 : index
    %c0_6 = arith.constant 0 : index
    %14 = vector.load %arg4[%c0_5, %c0_6] : memref<32x16xf32, #tpu.memory_space<vmem>>, vector<32x16xf32>
    %c0_7 = arith.constant 0 : index
    %c0_8 = arith.constant 0 : index
    %15 = vector.load %arg5[%c0_7, %c0_8] : memref<1x16xf32, #tpu.memory_space<vmem>>, vector<1x16xf32>
    %16 = tpu.concatenate %11, %13 in 0 : vector<8x32xf32>, vector<8x32xf32> -> vector<16x32xf32>
    %cst_9 = arith.constant dense<0.000000e+00> : vector<16x16xf32>
    %17 = tpu.matmul %16, %14, %cst_9 {dimension_numbers = #tpu.dot_dimension_numbers<[1], [0], [0], [1], [0, 0, 1, 1], [], []>} : vector<16x32xf32>, vector<32x16xf32>, vector<16x16xf32> -> vector<16x16xf32>
    %18 = vector.extract_strided_slice %17 {offsets = [0, 0], sizes = [8, 16], strides = [1, 1]} : vector<16x16xf32> to vector<8x16xf32>
    %19 = vector.broadcast %15 : vector<1x16xf32> to vector<8x16xf32>
    %20 = arith.addf %18, %19 : vector<8x16xf32>
    %21 = vector.extract_strided_slice %17 {offsets = [8, 0], sizes = [8, 16], strides = [1, 1]} : vector<16x16xf32> to vector<8x16xf32>
    %22 = math.exp %21 : vector<8x16xf32>
    %cst_10 = arith.constant 0.000000e+00 : f32
    %23 = vector.broadcast %cst_10 : f32 to vector<8x16xf32>
    %24 = arith.subf %23, %21 : vector<8x16xf32>
    %25 = math.exp %24 : vector<8x16xf32>
    %26 = arith.addf %22, %25 : vector<8x16xf32>
    %cst_11 = arith.constant 5.000000e-01 : f32
    %27 = vector.broadcast %cst_11 : f32 to vector<8x16xf32>
    %28 = arith.mulf %27, %26 : vector<8x16xf32>
    %29 = arith.subf %22, %25 : vector<8x16xf32>
    %cst_12 = arith.constant 5.000000e-01 : f32
    %30 = vector.broadcast %cst_12 : f32 to vector<8x16xf32>
    %31 = arith.mulf %30, %29 : vector<8x16xf32>
    %32 = math.sin %20 : vector<8x16xf32>
    %33 = arith.mulf %32, %28 : vector<8x16xf32>
    %34 = math.cos %20 : vector<8x16xf32>
    %35 = arith.mulf %34, %31 : vector<8x16xf32>
    %36 = arith.mulf %33, %33 : vector<8x16xf32>
    %37 = arith.mulf %35, %35 : vector<8x16xf32>
    %38 = arith.addf %36, %37 : vector<8x16xf32>
    %39 = math.sqrt %38 : vector<8x16xf32>
    %c0_13 = arith.constant 0 : index
    %c0_14 = arith.constant 0 : index
    %40 = vector.load %arg6[%c0_13, %c0_14] : memref<8x16xf32, #tpu.memory_space<vmem>>, vector<8x16xf32>
    tpu.vector_store %arg6[%c0_13, %c0_14], %39 {strides = array<i32>} : memref<8x16xf32, #tpu.memory_space<vmem>>, vector<8x16xf32>,
    return
  }
  func.func @transform_0(%arg0: i32) -> (i32, i32) {
    %c0_i32 = arith.constant 0 : i32
    %c0_i32_0 = arith.constant 0 : i32
    return %arg0, %c0_i32 : i32, i32
  }
  func.func @transform_1(%arg0: i32) -> (i32, i32) {
    %c0_i32 = arith.constant 0 : i32
    %c0_i32_0 = arith.constant 0 : i32
    %c0_i32_1 = arith.constant 0 : i32
    return %c0_i32, %c0_i32_0 : i32, i32
  }
  func.func @transform_2(%arg0: i32) -> (i32, i32) {
    %c0_i32 = arith.constant 0 : i32
    %c0_i32_0 = arith.constant 0 : i32
    %c0_i32_1 = arith.constant 0 : i32
    return %c0_i32, %c0_i32_0 : i32, i32
  }
  func.func @transform_3(%arg0: i32) -> (i32, i32) {
    %c0_i32 = arith.constant 0 : i32
    %c0_i32_0 = arith.constant 0 : i32
    %c0_i32_1 = arith.constant 0 : i32
    return %c0_i32, %c0_i32_0 : i32, i32
  }
  func.func @transform_4(%arg0: i32) -> (i32, i32) {
    %c0_i32 = arith.constant 0 : i32
    %c0_i32_0 = arith.constant 0 : i32
    %c0_i32_1 = arith.constant 0 : i32
    return %c0_i32, %c0_i32_0 : i32, i32
  }
  func.func @transform_5(%arg0: i32) -> (i32, i32) {
    %c0_i32 = arith.constant 0 : i32
    %c0_i32_0 = arith.constant 0 : i32
    return %arg0, %c0_i32 : i32, i32
  }
}

</mosaic_0001>

<llo_original>
// kernel: tpu_custom_call.1
$region0: #{tpu_custom_call.1}
  #allocation0 [shape = 'u32[]', space=smem, size = 0x4, offset = 0x4, fixed_abs, tag = 'smem constant byte address 0x4 - core index']
  #allocation1 [shape = 'u32[144,128]{1,0:T(1,128)}', space=vmem, size = 0x12000, scoped, tag = 'internal scratch']
  %s0 = inlined_call_operand.vmem [shape: f32[8,16], index: 0, kind: input, shape index: {}]
  %s1 = inlined_call_operand.vmem [shape: f32[16,32], index: 1, kind: input, shape index: {}]
  %s2 = inlined_call_operand.vmem [shape: f32[8,32], index: 2, kind: input, shape index: {}]
  %s3 = inlined_call_operand.vmem [shape: f32[32,16], index: 3, kind: input, shape index: {}]
  %s4 = inlined_call_operand.vmem [shape: f32[1,16], index: 4, kind: input, shape index: {}]
  %s5 = inlined_call_operand.hbm [shape: f32[8,16], index: 5, kind: output, shape index: {}]
  %s6 = sld [smem:[#allocation0]]
  $region30: #{tpu_custom_call.1} parent=0
    _
  %s8 = ssub.s32 1, %s6
  %s9 = scalar_select 0, %s8, %s6
  $region1: #{tpu_custom_call.1} parent=0
    #allocation2 [shape = 'u8[4096]{0}', space=vmem, size = 0x1000, scoped, tag = 'output window, operand 0, single buffered']
    #allocation3 [shape = 's32[1]{0}', space=sflag, size = 0x4, scoped, tag = 'scoped memory for tpu_custom_call.1']
    %10 = vsyncpa [#allocation3], 0
    // Predicated region
    $region2: #{tpu_custom_call.1} parent=1 // pred_check
      _
    $region3: #{tpu_custom_call.1} parent=1 // pred_check_branch
      %12 = sbr.rel (0) target = $region5
    $region4: #{tpu_custom_call.1} parent=1 // pred_region
      _
    $region5: #{tpu_custom_call.1} parent=1 // pred_fallthru
      _
    // Predicated region
    $region6: #{tpu_custom_call.1} parent=1 // pred_check
      _
    $region7: #{tpu_custom_call.1} parent=1 // pred_check_branch
      %14 = sbr.rel (0) target = $region9
    $region8: #{tpu_custom_call.1} parent=1 // pred_region
      _
    $region9: #{tpu_custom_call.1} parent=1 // pred_fallthru
      _
    // Predicated region
    $region10: #{tpu_custom_call.1} parent=1 // pred_check
      _
    $region11: #{tpu_custom_call.1} parent=1 // pred_check_branch
      %16 = sbr.rel (0) target = $region13
    $region12: #{tpu_custom_call.1} parent=1 // pred_region
      _
    $region13: #{tpu_custom_call.1} parent=1 // pred_fallthru
      _
    // Predicated region
    $region14: #{tpu_custom_call.1} parent=1 // pred_check
      _
    $region15: #{tpu_custom_call.1} parent=1 // pred_check_branch
      %18 = sbr.rel (0) target = $region17
    $region16: #{tpu_custom_call.1} parent=1 // pred_region
      _
    $region17: #{tpu_custom_call.1} parent=1 // pred_fallthru
      _
    // Predicated region
    $region18: #{tpu_custom_call.1} parent=1 // pred_check
      _
    $region19: #{tpu_custom_call.1} parent=1 // pred_check_branch
      %20 = sbr.rel (0) target = $region21
    $region20: #{tpu_custom_call.1} parent=1 // pred_region
      _
    $region21: #{tpu_custom_call.1} parent=1 // pred_fallthru
      _
    %v21 = vld [vmem:[%s0] sm:$0xff]
    %v22 = vld [vmem:[%s1] sm:$0xff]
    %v23 = vld [vmem:[%s1 + $0x8] sm:$0xff]
    %v24 = vld [vmem:[%s2] sm:$0xff]
    %v25 = vlaneseq
    %v26 = vshrl.u32 %v25, 7
    %v27 = vsub.s32 0, %v26
    %v28 = vrot.slane %v24, %v27
    %vm29 = vcmask 130048
    %v31 = vsel %vm29, %v21, 0
    %33 = vmatprep.subr.mxu0 0.0
    %34 = vmatpush1.msra.mxu0 %v22
    %35 = vmatprep.subr.mxu0 0.0
    %36 = vmatpush1.msra.mxu0 %v23
    %37 = vmatprep.subr.mxu0 0.0
    %38 = vmatpush1.msra.mxu0 0.0
    %39 = vmatprep.subr.mxu0 0.0
    %40 = vmatpush1.msra.mxu0 0.0
    %41 = vmatprep.subr.mxu0 0.0
    %42 = vmatpush1.msra.mxu0 0.0
    %43 = vmatprep.subr.mxu0 0.0
    %44 = vmatpush1.msra.mxu0 0.0
    %45 = vmatprep.subr.mxu0 0.0
    %46 = vmatpush1.msra.mxu0 0.0
    %47 = vmatprep.subr.mxu0 0.0
    %48 = vmatpush1.msra.mxu0 0.0
    %49 = vmatprep.subr.mxu0 0.0
    %50 = vmatpush1.msra.mxu0 0.0
    %51 = vmatprep.subr.mxu0 0.0
    %52 = vmatpush1.msra.mxu0 0.0
    %53 = vmatprep.subr.mxu0 0.0
    %54 = vmatpush1.msra.mxu0 0.0
    %55 = vmatprep.subr.mxu0 0.0
    %56 = vmatpush1.msra.mxu0 0.0
    %57 = vmatprep.subr.mxu0 0.0
    %58 = vmatpush1.msra.mxu0 0.0
    %59 = vmatprep.subr.mxu0 0.0
    %60 = vmatpush1.msra.mxu0 0.0
    %61 = vmatprep.subr.mxu0 0.0
    %62 = vmatpush1.msra.mxu0 0.0
    %63 = vmatprep.subr.mxu0 0.0
    %64 = vmatpush1.msra.mxu0 0.0
    %65 = vmatprep.subr.mxu0 0.0
    %66 = vmatpush1.msra.mxu0 0.0
    %67 = vmatprep.subr.mxu0 0.0
    %68 = vmatpush1.msra.mxu0 0.0
    %69 = vmatprep.subr.mxu0 0.0
    %70 = vmatpush1.msra.mxu0 0.0
    %71 = vmatprep.subr.mxu0 0.0
    %72 = vmatpush1.msra.mxu0 0.0
    %73 = vmatprep.subr.mxu0 0.0
    %74 = vmatpush1.msra.mxu0 0.0
    %75 = vmatprep.subr.mxu0 0.0
    %76 = vmatpush1.msra.mxu0 0.0
    %77 = vmatprep.subr.mxu0 0.0
    %78 = vmatpush1.msra.mxu0 0.0
    %79 = vmatprep.subr.mxu0 0.0
    %80 = vmatpush1.msra.mxu0 0.0
    %81 = vmatprep.subr.mxu0 0.0
    %82 = vmatpush1.msra.mxu0 0.0
    %83 = vmatprep.subr.mxu0 0.0
    %84 = vmatpush1.msra.mxu0 0.0
    %85 = vmatprep.subr.mxu0 0.0
    %86 = vmatpush1.msra.mxu0 0.0
    %87 = vmatprep.subr.mxu0 0.0
    %88 = vmatpush1.msra.mxu0 0.0
    %89 = vmatprep.subr.mxu0 0.0
    %90 = vmatpush1.msra.mxu0 0.0
    %91 = vmatprep.subr.mxu0 0.0
    %92 = vmatpush1.msra.mxu0 0.0
    %93 = vmatprep.subr.mxu0 0.0
    %94 = vmatpush1.msra.mxu0 0.0
    %95 = vmatprep.subr.mxu0 0.0
    %96 = vmatpush1.msra.mxu0 0.0
    %97 = vmatprep.mubr.f32.mxu0 0.0
    %98 = vmatmul.mubr.f32.gmra.mrb[0].mxu0 %v31
    %v99 = vpop.f32.mrb[0].mxu0
    %v100 = vadd.f32 %v28, %v99
    %v101 = vpop.f32.mrb[0].mxu0
    %102 = vdwg.mxu0
    %v103 = vand.u32 2147483647, %v100
    %vm104 = vcmp.le.f32.partialorder %v103, 0.7853982
    %vm105 = vcmp.lt.s32.totalorder %v100, 0
    %v106 = vand.u32 %v100, 2139095040
    %v107 = vshrl.u32 %v106, 23
    %v108 = vsub.s32 %v107, 127
    %v109 = vand.u32 2147483647, %v100
    %v110 = vand.u32 %v109, 8388607
    %v111 = vor.u32 %v110, 8388608
    %v112 = vsub.s32 0, %v111
    %v113 = vadd.s32 %v108, 1
    %vm114 = vcmp.gt.s32.totalorder %v113, 0
    %v115 = vsel %vm114, %v113, 0
    %v116 = vshrl.u32 %v115, 5
    %v117 = vand.u32 %v115, 31
    %v118 = vsub.s32 32, %v117
    %v119 = vshrl.u32 683565275, %v118
    %v120 = vshll.u32 683565275, %v117
    %v121 = vshrl.u32 2475754826, %v118
    %v122 = vor.u32 %v120, %v121
    %v123 = vshll.u32 2475754826, %v117
    %v124 = vshrl.u32 2131351028, %v118
    %v125 = vor.u32 %v123, %v124
    %v126 = vshll.u32 2131351028, %v117
    %v127 = vshrl.u32 2102212464, %v118
    %v128 = vor.u32 %v126, %v127
    %v129 = vshll.u32 2102212464, %v117
    %v130 = vshrl.u32 920167782, %v118
    %v131 = vor.u32 %v129, %v130
    %v132 = vshll.u32 920167782, %v117
    %v133 = vshrl.u32 1326507024, %v118
    %v134 = vor.u32 %v132, %v133
    %vm135 = vcmp.lt.s32.totalorder %v116, 1
    %vm136 = vcmp.lt.s32.totalorder %v116, 2
    %vm137 = vcmp.lt.s32.totalorder %v116, 3
    %vm138 = vcmp.lt.s32.totalorder %v116, 4
    %v139 = vsel %vm135, %v119, %v122
    %v140 = vsel %vm138, %v128, 2102212464
    %v141 = vsel %vm137, %v125, %v140
    %v142 = vsel %vm136, %v139, %v141
    %v143 = vsel %vm135, %v122, %v125
    %v144 = vsel %vm138, %v131, 920167782
    %v145 = vsel %vm137, %v128, %v144
    %v146 = vsel %vm136, %v143, %v145
    %v147 = vsel %vm135, %v125, %v128
    %v148 = vsel %vm138, %v134, 1326507024
    %v149 = vsel %vm137, %v131, %v148
    %v150 = vsel %vm136, %v147, %v149
    %v151 = vshll.u32 %v111, 8
    %v152 = vmul.u32.u64.compose %v151, %v150
    %v153 = vextract.low.u32 %v152
    %v154 = vextract.high.u32 %v152
    %v155 = vmul.u32.u64.compose %v151, %v146
    %v156 = vextract.low.u32 %v155
    %v157 = vextract.high.u32 %v155
    %v158 = vmul.u32 %v151, %v142
    %v159 = vadd.s32 %v154, %v156
    %vm160 = vc.u32 %v154, %v156
    %v161 = vadd.s32 %v157, 1
    %v162 = vsel %vm160, %v161, %v157
    %v163 = vadd.s32 %v158, %v162
    %v164 = vadd.s32 %v163, 536870912
    %v165 = vshrl.u32 %v164, 30
    %v166 = vshll.u32 %v165, 30
    %v167 = vsub.s32 %v163, %v166
    %vm168 = vcmp.lt.s32.totalorder %v167, 0
    %v169 = vsub.s32 0, %v167
    %v170 = vsel %vm168, %v169, %v167
    %v171 = vclz %v170
    %v172 = vsub.s32 %v171, 2
    %vm173 = vcmp.gt.s32.totalorder 0, %v172
    %v174 = vsel %vm173, 0, %v172
    %v175 = vsub.s32 32, %v174
    %v176 = vshll.u32 %v167, %v174
    %v177 = vshrl.u32 %v159, %v175
    %v178 = vor.u32 %v176, %v177
    %v179 = vsub.s32 4294967266, %v174
    %v180 = vadd.s32 %v179, 127
    %v181 = vshll.u32 %v180, 23
    %v182 = vor.u32 4788187, %v181
    %v183 = vand.u32 2147483647, %v182
    %v185 = vcvt.s32.f32 %v178
    %v186 = vmul.f32 %v185, %v183
    %v187 = vxor.u32 %v186, 2147483648
    %v188 = vsel %vm105, %v187, %v186
    %v189 = vsub.s32 4, %v165
    %v190 = vsel %vm105, %v189, %v165
    %v191 = vsel %vm104, %v100, %v188
    %v192 = vsel %vm104, 0, %v190
    %v193 = vcosq.f32.pop %v191
    %v194 = vsinq.f32.pop %v191
    %vm195 = vweird.f32 %v100
    %v196 = vadd.s32 %v192, 3
    %v197 = vand.u32 %v196, 3
    %vm198 = vcmp.lt.s32.totalorder %v197, 2
    %vm199 = vcmp.eq.s32.totalorder %v197, 0
    %v200 = vxor.u32 %v194, 2147483648
    %v201 = vsel %vm199, %v193, %v200
    %vm202 = vcmp.eq.s32.totalorder %v197, 2
    %v203 = vxor.u32 %v193, 2147483648
    %v204 = vsel %vm202, %v203, %v194
    %v205 = vsel %vm198, %v201, %v204
    %v206 = vsel %vm195, nan, %v205
    %v207 = vlaneseq
    %v208 = vshrl.u32 %v207, 7
    %v209 = vsub.s32 1, %v208
    %v210 = vrot.slane %v24, %v209
    %v211 = vmul.f32 %v206, %v210
    %v212 = vlaneseq
    %v213 = vshrl.u32 %v212, 7
    %v214 = vsub.s32 2, %v213
    %v215 = vrot.slane %v24, %v214
    %v216 = vmul.f32 %v206, %v215
    %v217 = vld [vmem:[%s3] sm:$0xff]
    %v218 = vld [vmem:[%s3 + $0x8] sm:$0xff]
    %v219 = vld [vmem:[%s3 + $0x10] sm:$0xff]
    %v220 = vld [vmem:[%s3 + $0x18] sm:$0xff]
    %v221 = vld [vmem:[%s4] sm:$0x1]
    %vm222 = vcmask 261120
    %v224 = vsel %vm222, %v211, 0
    %v227 = vsel %vm222, %v216, 0
    %229 = vmatprep.subr.mxu0 0.0
    %230 = vmatpush1.msra.mxu0 %v217
    %231 = vmatprep.subr.mxu0 0.0
    %232 = vmatpush1.msra.mxu0 %v218
    %233 = vmatprep.subr.mxu0 0.0
    %234 = vmatpush1.msra.mxu0 %v219
    %235 = vmatprep.subr.mxu0 0.0
    %236 = vmatpush1.msra.mxu0 %v220
    %237 = vmatprep.subr.mxu0 0.0
    %238 = vmatpush1.msra.mxu0 0.0
    %239 = vmatprep.subr.mxu0 0.0
    %240 = vmatpush1.msra.mxu0 0.0
    %241 = vmatprep.subr.mxu0 0.0
    %242 = vmatpush1.msra.mxu0 0.0
    %243 = vmatprep.subr.mxu0 0.0
    %244 = vmatpush1.msra.mxu0 0.0
    %245 = vmatprep.subr.mxu0 0.0
    %246 = vmatpush1.msra.mxu0 0.0
    %247 = vmatprep.subr.mxu0 0.0
    %248 = vmatpush1.msra.mxu0 0.0
    %249 = vmatprep.subr.mxu0 0.0
    %250 = vmatpush1.msra.mxu0 0.0
    %251 = vmatprep.subr.mxu0 0.0
    %252 = vmatpush1.msra.mxu0 0.0
    %253 = vmatprep.subr.mxu0 0.0
    %254 = vmatpush1.msra.mxu0 0.0
    %255 = vmatprep.subr.mxu0 0.0
    %256 = vmatpush1.msra.mxu0 0.0
    %257 = vmatprep.subr.mxu0 0.0
    %258 = vmatpush1.msra.mxu0 0.0
    %259 = vmatprep.subr.mxu0 0.0
    %260 = vmatpush1.msra.mxu0 0.0
    %261 = vmatprep.subr.mxu0 0.0
    %262 = vmatpush1.msra.mxu0 0.0
    %263 = vmatprep.subr.mxu0 0.0
    %264 = vmatpush1.msra.mxu0 0.0
    %265 = vmatprep.subr.mxu0 0.0
    %266 = vmatpush1.msra.mxu0 0.0
    %267 = vmatprep.subr.mxu0 0.0
    %268 = vmatpush1.msra.mxu0 0.0
    %269 = vmatprep.subr.mxu0 0.0
    %270 = vmatpush1.msra.mxu0 0.0
    %271 = vmatprep.subr.mxu0 0.0
    %272 = vmatpush1.msra.mxu0 0.0
    %273 = vmatprep.subr.mxu0 0.0
    %274 = vmatpush1.msra.mxu0 0.0
    %275 = vmatprep.subr.mxu0 0.0
    %276 = vmatpush1.msra.mxu0 0.0
    %277 = vmatprep.subr.mxu0 0.0
    %278 = vmatpush1.msra.mxu0 0.0
    %279 = vmatprep.subr.mxu0 0.0
    %280 = vmatpush1.msra.mxu0 0.0
    %281 = vmatprep.subr.mxu0 0.0
    %282 = vmatpush1.msra.mxu0 0.0
    %283 = vmatprep.subr.mxu0 0.0
    %284 = vmatpush1.msra.mxu0 0.0
    %285 = vmatprep.subr.mxu0 0.0
    %286 = vmatpush1.msra.mxu0 0.0
    %287 = vmatprep.subr.mxu0 0.0
    %288 = vmatpush1.msra.mxu0 0.0
    %289 = vmatprep.subr.mxu0 0.0
    %290 = vmatpush1.msra.mxu0 0.0
    %291 = vmatprep.subr.mxu0 0.0
    %292 = vmatpush1.msra.mxu0 0.0
    %293 = vmatprep.mubr.f32.mxu0 0.0
    %294 = vmatmul.mubr.f32.gmra.mrb[0].mxu0 %v224
    %v295 = vpop.f32.mrb[0].mxu0
    %v296 = vadd.f32 0.0, %v295
    %v297 = vpop.f32.mrb[0].mxu0
    %298 = vmatprep.mubr.f32.mxu0 0.0
    %299 = vmatmul.mubr.f32.gmra.mrb[0].mxu0 %v227
    %v300 = vpop.f32.mrb[0].mxu0
    %v301 = vadd.f32 0.0, %v300
    %v302 = vpop.f32.mrb[0].mxu0
    %303 = vdwg.mxu0
    %v305 = vlaneseq
    %v306 = vshrl.u32 %v305, 7
    %v307 = vsub.s32 0, %v306
    %v308 = vrot.slane %v221, %v307
    %v310 = vadd.f32 %v296, %v308
    %v311 = vmul.f32 %v301, 1.442695
    %v312 = vpow.pop %v311
    %v313 = vsub.f32 0.0, %v301
    %v314 = vmul.f32 %v313, 1.442695
    %v315 = vpow.pop %v314
    %v316 = vadd.f32 %v312, %v315
    %v317 = vmul.f32 %v316, 0.5
    %v318 = vsub.f32 %v312, %v315
    %v319 = vmul.f32 %v318, 0.5
    %v320 = vand.u32 2147483647, %v310
    %vm321 = vcmp.le.f32.partialorder %v320, 0.7853982
    %vm322 = vcmp.lt.s32.totalorder %v310, 0
    %v323 = vand.u32 %v310, 2139095040
    %v324 = vshrl.u32 %v323, 23
    %v325 = vsub.s32 %v324, 127
    %v326 = vand.u32 2147483647, %v310
    %v327 = vand.u32 %v326, 8388607
    %v328 = vor.u32 %v327, 8388608
    %v329 = vsub.s32 0, %v328
    %v330 = vadd.s32 %v325, 1
    %vm331 = vcmp.gt.s32.totalorder %v330, 0
    %v332 = vsel %vm331, %v330, 0
    %v333 = vshrl.u32 %v332, 5
    %v334 = vand.u32 %v332, 31
    %v335 = vsub.s32 32, %v334
    %v336 = vshrl.u32 683565275, %v335
    %v337 = vshll.u32 683565275, %v334
    %v338 = vshrl.u32 2475754826, %v335
    %v339 = vor.u32 %v337, %v338
    %v340 = vshll.u32 2475754826, %v334
    %v341 = vshrl.u32 2131351028, %v335
    %v342 = vor.u32 %v340, %v341
    %v343 = vshll.u32 2131351028, %v334
    %v344 = vshrl.u32 2102212464, %v335
    %v345 = vor.u32 %v343, %v344
    %v346 = vshll.u32 2102212464, %v334
    %v347 = vshrl.u32 920167782, %v335
    %v348 = vor.u32 %v346, %v347
    %v349 = vshll.u32 920167782, %v334
    %v350 = vshrl.u32 1326507024, %v335
    %v351 = vor.u32 %v349, %v350
    %vm352 = vcmp.lt.s32.totalorder %v333, 1
    %vm353 = vcmp.lt.s32.totalorder %v333, 2
    %vm354 = vcmp.lt.s32.totalorder %v333, 3
    %vm355 = vcmp.lt.s32.totalorder %v333, 4
    %v356 = vsel %vm352, %v336, %v339
    %v357 = vsel %vm355, %v345, 2102212464
    %v358 = vsel %vm354, %v342, %v357
    %v359 = vsel %vm353, %v356, %v358
    %v360 = vsel %vm352, %v339, %v342
    %v361 = vsel %vm355, %v348, 920167782
    %v362 = vsel %vm354, %v345, %v361
    %v363 = vsel %vm353, %v360, %v362
    %v364 = vsel %vm352, %v342, %v345
    %v365 = vsel %vm355, %v351, 1326507024
    %v366 = vsel %vm354, %v348, %v365
    %v367 = vsel %vm353, %v364, %v366
    %v368 = vshll.u32 %v328, 8
    %v369 = vmul.u32.u64.compose %v368, %v367
    %v370 = vextract.low.u32 %v369
    %v371 = vextract.high.u32 %v369
    %v372 = vmul.u32.u64.compose %v368, %v363
    %v373 = vextract.low.u32 %v372
    %v374 = vextract.high.u32 %v372
    %v375 = vmul.u32 %v368, %v359
    %v376 = vadd.s32 %v371, %v373
    %vm377 = vc.u32 %v371, %v373
    %v378 = vadd.s32 %v374, 1
    %v379 = vsel %vm377, %v378, %v374
    %v380 = vadd.s32 %v375, %v379
    %v381 = vadd.s32 %v380, 536870912
    %v382 = vshrl.u32 %v381, 30
    %v383 = vshll.u32 %v382, 30
    %v384 = vsub.s32 %v380, %v383
    %vm385 = vcmp.lt.s32.totalorder %v384, 0
    %v386 = vsub.s32 0, %v384
    %v387 = vsel %vm385, %v386, %v384
    %v388 = vclz %v387
    %v389 = vsub.s32 %v388, 2
    %vm390 = vcmp.gt.s32.totalorder 0, %v389
    %v391 = vsel %vm390, 0, %v389
    %v392 = vsub.s32 32, %v391
    %v393 = vshll.u32 %v384, %v391
    %v394 = vshrl.u32 %v376, %v392
    %v395 = vor.u32 %v393, %v394
    %v396 = vsub.s32 4294967266, %v391
    %v397 = vadd.s32 %v396, 127
    %v398 = vshll.u32 %v397, 23
    %v399 = vor.u32 4788187, %v398
    %v400 = vand.u32 2147483647, %v399
    %v402 = vcvt.s32.f32 %v395
    %v403 = vmul.f32 %v402, %v400
    %v404 = vxor.u32 %v403, 2147483648
    %v405 = vsel %vm322, %v404, %v403
    %v406 = vsub.s32 4, %v382
    %v407 = vsel %vm322, %v406, %v382
    %v408 = vsel %vm321, %v310, %v405
    %v409 = vsel %vm321, 0, %v407
    %v410 = vcosq.f32.pop %v408
    %v411 = vsinq.f32.pop %v408
    %vm412 = vweird.f32 %v310
    %v413 = vadd.s32 %v409, 3
    %v414 = vand.u32 %v413, 3
    %vm415 = vcmp.lt.s32.totalorder %v414, 2
    %vm416 = vcmp.eq.s32.totalorder %v414, 0
    %v417 = vxor.u32 %v411, 2147483648
    %v418 = vsel %vm416, %v410, %v417
    %vm419 = vcmp.eq.s32.totalorder %v414, 2
    %v420 = vxor.u32 %v410, 2147483648
    %v421 = vsel %vm419, %v420, %v411
    %v422 = vsel %vm415, %v418, %v421
    %v423 = vsel %vm412, nan, %v422
    %v424 = vmul.f32 %v423, %v317
    %v425 = vand.u32 2147483647, %v310
    %vm426 = vcmp.le.f32.partialorder %v425, 0.7853982
    %vm427 = vcmp.lt.s32.totalorder %v310, 0
    %v428 = vand.u32 %v310, 2139095040
    %v429 = vshrl.u32 %v428, 23
    %v430 = vsub.s32 %v429, 127
    %v431 = vand.u32 2147483647, %v310
    %v432 = vand.u32 %v431, 8388607
    %v433 = vor.u32 %v432, 8388608
    %v434 = vsub.s32 0, %v433
    %v435 = vadd.s32 %v430, 1
    %vm436 = vcmp.gt.s32.totalorder %v435, 0
    %v437 = vsel %vm436, %v435, 0
    %v438 = vshrl.u32 %v437, 5
    %v439 = vand.u32 %v437, 31
    %v440 = vsub.s32 32, %v439
    %v441 = vshrl.u32 683565275, %v440
    %v442 = vshll.u32 683565275, %v439
    %v443 = vshrl.u32 2475754826, %v440
    %v444 = vor.u32 %v442, %v443
    %v445 = vshll.u32 2475754826, %v439
    %v446 = vshrl.u32 2131351028, %v440
    %v447 = vor.u32 %v445, %v446
    %v448 = vshll.u32 2131351028, %v439
    %v449 = vshrl.u32 2102212464, %v440
    %v450 = vor.u32 %v448, %v449
    %v451 = vshll.u32 2102212464, %v439
    %v452 = vshrl.u32 920167782, %v440
    %v453 = vor.u32 %v451, %v452
    %v454 = vshll.u32 920167782, %v439
    %v455 = vshrl.u32 1326507024, %v440
    %v456 = vor.u32 %v454, %v455
    %vm457 = vcmp.lt.s32.totalorder %v438, 1
    %vm458 = vcmp.lt.s32.totalorder %v438, 2
    %vm459 = vcmp.lt.s32.totalorder %v438, 3
    %vm460 = vcmp.lt.s32.totalorder %v438, 4
    %v461 = vsel %vm457, %v441, %v444
    %v462 = vsel %vm460, %v450, 2102212464
    %v463 = vsel %vm459, %v447, %v462
    %v464 = vsel %vm458, %v461, %v463
    %v465 = vsel %vm457, %v444, %v447
    %v466 = vsel %vm460, %v453, 920167782
    %v467 = vsel %vm459, %v450, %v466
    %v468 = vsel %vm458, %v465, %v467
    %v469 = vsel %vm457, %v447, %v450
    %v470 = vsel %vm460, %v456, 1326507024
    %v471 = vsel %vm459, %v453, %v470
    %v472 = vsel %vm458, %v469, %v471
    %v473 = vshll.u32 %v433, 8
    %v474 = vmul.u32.u64.compose %v473, %v472
    %v475 = vextract.low.u32 %v474
    %v476 = vextract.high.u32 %v474
    %v477 = vmul.u32.u64.compose %v473, %v468
    %v478 = vextract.low.u32 %v477
    %v479 = vextract.high.u32 %v477
    %v480 = vmul.u32 %v473, %v464
    %v481 = vadd.s32 %v476, %v478
    %vm482 = vc.u32 %v476, %v478
    %v483 = vadd.s32 %v479, 1
    %v484 = vsel %vm482, %v483, %v479
    %v485 = vadd.s32 %v480, %v484
    %v486 = vadd.s32 %v485, 536870912
    %v487 = vshrl.u32 %v486, 30
    %v488 = vshll.u32 %v487, 30
    %v489 = vsub.s32 %v485, %v488
    %vm490 = vcmp.lt.s32.totalorder %v489, 0
    %v491 = vsub.s32 0, %v489
    %v492 = vsel %vm490, %v491, %v489
    %v493 = vclz %v492
    %v494 = vsub.s32 %v493, 2
    %vm495 = vcmp.gt.s32.totalorder 0, %v494
    %v496 = vsel %vm495, 0, %v494
    %v497 = vsub.s32 32, %v496
    %v498 = vshll.u32 %v489, %v496
    %v499 = vshrl.u32 %v481, %v497
    %v500 = vor.u32 %v498, %v499
    %v501 = vsub.s32 4294967266, %v496
    %v502 = vadd.s32 %v501, 127
    %v503 = vshll.u32 %v502, 23
    %v504 = vor.u32 4788187, %v503
    %v505 = vand.u32 2147483647, %v504
    %v507 = vcvt.s32.f32 %v500
    %v508 = vmul.f32 %v507, %v505
    %v509 = vxor.u32 %v508, 2147483648
    %v510 = vsel %vm427, %v509, %v508
    %v511 = vsub.s32 4, %v487
    %v512 = vsel %vm427, %v511, %v487
    %v513 = vsel %vm426, %v310, %v510
    %v514 = vsel %vm426, 0, %v512
    %v515 = vcosq.f32.pop %v513
    %v516 = vsinq.f32.pop %v513
    %vm517 = vweird.f32 %v310
    %v518 = vand.u32 %v514, 3
    %vm519 = vcmp.lt.s32.totalorder %v518, 2
    %vm520 = vcmp.eq.s32.totalorder %v518, 0
    %v521 = vxor.u32 %v516, 2147483648
    %v522 = vsel %vm520, %v515, %v521
    %vm523 = vcmp.eq.s32.totalorder %v518, 2
    %v524 = vxor.u32 %v515, 2147483648
    %v525 = vsel %vm523, %v524, %v516
    %v526 = vsel %vm519, %v522, %v525
    %v527 = vsel %vm517, nan, %v526
    %v528 = vmul.f32 %v527, %v319
    %v529 = vmul.f32 %v424, %v424
    %v530 = vmul.f32 %v528, %v528
    %v531 = vadd.f32 %v529, %v530
    %v532 = vrsqrt.pop %v531
    %v533 = vmul.f32 %v531, %v532
    %vm534 = vcmp.eq.f32.partialorder %v531, inf
    %v535 = vsel %vm534, %v531, %v533
    %vm536 = vcmp.eq.f32.partialorder %v531, 0.0
    %v537 = vand.u32 %v531, 2147483648
    %v538 = vsel %vm536, %v537, %v535
    %539 = vst.msk [vmem:[#allocation2] sm:$0xff] %vm29, %v538
    // Predicated region
    $region22: #{tpu_custom_call.1} parent=1 // pred_check
      _
    $region23: #{tpu_custom_call.1} parent=1 // pred_check_branch
      %541 = sbr.rel (0) target = $region25
    $region24: #{tpu_custom_call.1} parent=1 // pred_region
      %s543 = ssub.s32 128, 128
      %544 = vsyncadd [#allocation3], %s543
      %s546 = sshll.u32 [#allocation2], 4
      %s547 = int_to_ptr.vmem [resolvable:$true] %s546
      %549 = dma.vmem_to_hbm [thread:$0]  %s547, 128, %s5, [#allocation3]
    $region25: #{tpu_custom_call.1} parent=1 // pred_fallthru
      _
    // Predicated region
    $region26: #{tpu_custom_call.1} parent=1 // pred_check
      _
    $region27: #{tpu_custom_call.1} parent=1 // pred_check_branch
      %551 = sbr.rel (0) target = $region29
    $region28: #{tpu_custom_call.1} parent=1 // pred_region
      %552 = dma.done [#allocation3], 128
    $region29: #{tpu_custom_call.1} parent=1 // pred_fallthru
      _
    %553 = vsyncpa [#allocation3], 1

</llo_original>
